<compile_context>
chip_gen: v7x
topology: tpu7x:2x2x1
jax: 0.10.0
libtpu: 0.0.40
codegen_flags: <defaults>
</compile_context>

<pallas_src>
import jax
import jax.numpy as jnp
from jax import lax
from jax.experimental import pallas as pl
from jax.experimental.pallas import tpu as pltpu

EPS = 1e-5
LEAKY_SLOPE = 0.01  # PyTorch LeakyReLU default negative_slope


# --------------------------------- Pallas kernel ---------------------------------
def _make_kernel(H, W, Cmid_p, Cout_p):
    def _divmod_const(pos, n):
        # pos // n, pos % n with shift/and when n is a power of two (pos >= 0).
        if n & (n - 1) == 0:
            k = n.bit_length() - 1
            return pos >> k, pos & (n - 1)
        return pos // n, pos % n

    def kernel(x_ref, w1d_ref, w2_ref, bn_ref, out_ref):
        L = x_ref.shape[1]
        x = x_ref[...]                                   # (Cin_p, L) lane-dense input

        # Per-tap validity conditions from an in-kernel iota (no mask operand / DMA).
        pos = lax.broadcasted_iota(jnp.int32, (1, L), 1)
        q, xw = _divmod_const(pos, W)                    # xw = x coord
        _, yh = _divmod_const(q, H)                      # yh = y coord
        row_ok = (yh > 0, None, yh < H - 1)              # dy = 0, 1, 2
        col_ok = (xw > 0, None, xw < W - 1)              # dx = 0, 1, 2

        def im2col(v):
            # v: (C8, L), C8 multiple of 8 -> (9*C8, L) im2col matrix, tap-major.
            # NOTE: pltpu.roll wraps across the flat N*H*W axis; every wrapped lane is also
            # out-of-image for its tap, so the masks below zero it.  This equivalence holds
            # only for 3x3 / stride 1 / SAME convolution -- revisit if stride/dilation change.
            slabs = []
            for dy in range(3):
                for dx in range(3):
                    if dy == 1 and dx == 1:              # centre tap: no shift, never padded
                        slabs.append(v)
                        continue
                    off = (dy - 1) * W + (dx - 1)
                    patch = pltpu.roll(v, shift=(-off) % L, axis=1)   # XLU lane rotate
                    cond = row_ok[dy]
                    if col_ok[dx] is not None:
                        cond = col_ok[dx] if cond is None else jnp.logical_and(cond, col_ok[dx])
                    slabs.append(jnp.where(cond, patch, 0.0))
            return jnp.concatenate(slabs, axis=0)        # (9*C8, L), 8-aligned sublane concat

        def bn(y, g, be):
            # Training-mode BN (biased variance), folded into per-channel scale/shift.
            mu = jnp.mean(y, axis=1, keepdims=True)
            var = jnp.mean(jnp.square(y - mu), axis=1, keepdims=True)
            s = g * lax.rsqrt(var + EPS)                 # (C,1) math only
            t = be - mu * s
            return y * s + t                             # single slab pass

        # ---- conv1 (3x3) + skip conv (1x1 embedded at centre tap) in ONE MXU matmul ----
        a = jnp.dot(w1d_ref[...], im2col(x), preferred_element_type=jnp.float32)  # (16, L)
        y = bn(a, bn_ref[:, 0:1], bn_ref[:, 1:2])        # BN1 | BNd, shared stacked reduce

        y1 = y[0:Cmid_p]                                 # main path
        y1 = jnp.where(y1 > 0, y1, LEAKY_SLOPE * y1)     # LeakyReLU
        yd = y[Cmid_p:Cmid_p + Cout_p]                   # skip path (padded rows are zero)

        # ---- conv2 (3x3) -> BN2 ----
        a2 = jnp.dot(w2_ref[...], im2col(y1), preferred_element_type=jnp.float32)  # (Cout_p, L)
        y2 = bn(a2, bn_ref[0:Cout_p, 2:3], bn_ref[0:Cout_p, 3:4])

        out_ref[...] = y2 + yd                           # full (8,128)-tile lane-dense store

    return kernel


# --------------------------------- host wrapper ---------------------------------
@jax.jit
def residual_block(x_nchw, params):
    N, Cin, H, W = x_nchw.shape
    Cmid = params["w1"].shape[0]
    Cout = params["w2"].shape[0]
    L = N * H * W
    rup8 = lambda c: ((c + 7) // 8) * 8
    Cin_p, Cmid_p, Cout_p = rup8(Cin), rup8(Cmid), rup8(Cout)

    # --- tiny glue: lane-dense relayout of the 8 KB input + constant weight repacking ---
    x_flat = jnp.transpose(x_nchw, (1, 0, 2, 3)).astype(jnp.float32).reshape(Cin, L)
    x_flat = jnp.pad(x_flat, ((0, Cin_p - Cin), (0, 0)))            # (Cin_p, L)

    def prep3x3(w, ci_pad, co_pad):  # (Co, Ci, 3, 3) -> (co_pad, 9*ci_pad), tap-major
        co, ci = w.shape[0], w.shape[1]
        wt = jnp.transpose(w, (0, 2, 3, 1)).astype(jnp.float32)     # (Co, 3, 3, Ci)
        wt = jnp.pad(wt, ((0, 0), (0, 0), (0, 0), (0, ci_pad - ci))).reshape(co, 9 * ci_pad)
        return jnp.pad(wt, ((0, co_pad - co), (0, 0)))

    w1m = prep3x3(params["w1"], Cin_p, Cmid_p)                      # (Cmid_p, 9*Cin_p)
    w2m = prep3x3(params["w2"], Cmid_p, Cout_p)                     # (Cout_p, 9*Cmid_p)

    # skip 1x1 weights embedded in the centre-tap (t=4) channel block of the im2col K axis
    wd = params["wd"].reshape(Cout, Cin).astype(jnp.float32)
    wdm = jnp.zeros((Cout_p, 9 * Cin_p), jnp.float32)
    wdm = wdm.at[:Cout, 4 * Cin_p:4 * Cin_p + Cin].set(wd)
    w1d = jnp.concatenate([w1m, wdm], axis=0)                       # (Cmid_p + Cout_p, 9*Cin_p)

    # packed BN affine (Cmid_p+Cout_p, 4): col0/1 = stacked gamma/beta for BN1|BNd,
    # col2/3 = gamma2/beta2 (rows beyond the real channel count are zero -> padded rows -> 0).
    def padvec(v, rows):
        return jnp.pad(v.astype(jnp.float32), (0, rows - v.shape[0]))

    R = Cmid_p + Cout_p
    g_stack = jnp.concatenate([padvec(params["g1"], Cmid_p), padvec(params["gd"], Cout_p)])
    b_stack = jnp.concatenate([padvec(params["be1"], Cmid_p), padvec(params["bed"], Cout_p)])
    bn_packed = jnp.stack([g_stack, b_stack,
                           padvec(params["g2"], R), padvec(params["be2"], R)], axis=1)  # (R, 4)

    out_flat = pl.pallas_call(
        _make_kernel(H, W, Cmid_p, Cout_p),
        out_shape=jax.ShapeDtypeStruct((Cout_p, L), jnp.float32),   # Cout padded -> full-tile vst
        in_specs=[pl.BlockSpec(memory_space=pltpu.MemorySpace.VMEM)] * 4,
        out_specs=pl.BlockSpec(memory_space=pltpu.MemorySpace.VMEM),
    )(x_flat, w1d, w2m, bn_packed)

    # (Cout_p, N*H*W) -> (N, Cout, H, W): 8 KB relayout, cheapest left to XLA.
    return jnp.transpose(out_flat[:Cout].reshape(Cout, N, H, W), (1, 0, 2, 3))


# ----------------------------- pure-JAX reference -----------------------------
def residual_block_ref(x, p):
    def conv(v, w, b):
        y = lax.conv_general_dilated(v, w, window_strides=(1, 1), padding="SAME",
                                     dimension_numbers=("NCHW", "OIHW", "NCHW"))
        return y + b.reshape(1, -1, 1, 1)

    def bn(y, g, be):
        mu = jnp.mean(y, axis=(0, 2, 3), keepdims=True)
        var = jnp.mean((y - mu) ** 2, axis=(0, 2, 3), keepdims=True)
        return (y - mu) * lax.rsqrt(var + EPS) * g.reshape(1, -1, 1, 1) \
            + be.reshape(1, -1, 1, 1)

    y = bn(conv(x, p["w1"], p["b1"]), p["g1"], p["be1"])
    y = jnp.where(y > 0, y, LEAKY_SLOPE * y)
    y = bn(conv(y, p["w2"], p["b2"]), p["g2"], p["be2"])
    r = bn(conv(x, p["wd"], p["bd"]), p["gd"], p["bed"])
    return y + r


# ----------------------------------- main -----------------------------------
if __name__ == "__main__":
    N, Cin, Cmid, Cout, H, W = 2, 4, 8, 4, 16, 16

    key = jax.random.PRNGKey(0)
    ks = jax.random.split(key, 12)
    x = jax.random.normal(ks[0], (N, Cin, H, W), jnp.float32)

    params = {
        # PyTorch-native layouts: conv weights OIHW, biases / BN affine per-channel vectors.
        "w1": 0.2 * jax.random.normal(ks[1], (Cmid, Cin, 3, 3), jnp.float32),
        "b1": 0.1 * jax.random.normal(ks[2], (Cmid,), jnp.float32),
        "g1": 1.0 + 0.1 * jax.random.normal(ks[3], (Cmid,), jnp.float32),
        "be1": 0.1 * jax.random.normal(ks[4], (Cmid,), jnp.float32),
        "w2": 0.2 * jax.random.normal(ks[5], (Cout, Cmid, 3, 3), jnp.float32),
        "b2": 0.1 * jax.random.normal(ks[6], (Cout,), jnp.float32),
        "g2": 1.0 + 0.1 * jax.random.normal(ks[7], (Cout,), jnp.float32),
        "be2": 0.1 * jax.random.normal(ks[8], (Cout,), jnp.float32),
        "wd": 0.2 * jax.random.normal(ks[9], (Cout, Cin, 1, 1), jnp.float32),
        "bd": 0.1 * jax.random.normal(ks[10], (Cout,), jnp.float32),
        "gd": 1.0 + 0.1 * jax.random.normal(ks[11], (Cout,), jnp.float32),
        "bed": jnp.zeros((Cout,), jnp.float32),
    }

    out = jax.block_until_ready(residual_block(x, params))
    ref = jax.block_until_ready(residual_block_ref(x, params))

    assert out.shape == (N, Cout, H, W), out.shape
    err = float(jnp.max(jnp.abs(out - ref)))
    assert jnp.allclose(out, ref, rtol=2e-3, atol=2e-3), f"max abs err = {err}"

    print("KERNEL_OK")
</pallas_src>

<mosaic_0001>
module attributes {stable_mosaic.version = 11 : i64} {
  func.func @kernel(%arg0: memref<8x512xf32, #tpu.memory_space<vmem>>, %arg1: memref<16x72xf32, #tpu.memory_space<vmem>>, %arg2: memref<8x72xf32, #tpu.memory_space<vmem>>, %arg3: memref<16x4xf32, #tpu.memory_space<vmem>>, %arg4: memref<8x512xf32, #tpu.memory_space<vmem>>) attributes {dimension_semantics = [], scalar_prefetch = 0 : i64, scratch_operands = 0 : i64, tpu.core_type = #tpu.core_type<tc>} {
    %c0 = arith.constant 0 : index
    %c0_0 = arith.constant 0 : index
    %0 = vector.load %arg0[%c0, %c0_0] : memref<8x512xf32, #tpu.memory_space<vmem>>, vector<8x512xf32>
    %1 = tpu.iota {dimensions = array<i32: 1>} : vector<1x512xi32>
    %c4_i32 = arith.constant 4 : i32
    %2 = vector.broadcast %c4_i32 : i32 to vector<1x512xi32>
    %3 = arith.shrsi %1, %2 : vector<1x512xi32>
    %c15_i32 = arith.constant 15 : i32
    %4 = vector.broadcast %c15_i32 : i32 to vector<1x512xi32>
    %5 = arith.andi %1, %4 : vector<1x512xi32>
    %c15_i32_1 = arith.constant 15 : i32
    %6 = vector.broadcast %c15_i32_1 : i32 to vector<1x512xi32>
    %7 = arith.andi %3, %6 : vector<1x512xi32>
    %c0_i32 = arith.constant 0 : i32
    %8 = vector.broadcast %c0_i32 : i32 to vector<1x512xi32>
    %9 = arith.cmpi sgt, %7, %8 : vector<1x512xi32>
    %c15_i32_2 = arith.constant 15 : i32
    %10 = vector.broadcast %c15_i32_2 : i32 to vector<1x512xi32>
    %11 = arith.cmpi slt, %7, %10 : vector<1x512xi32>
    %c0_i32_3 = arith.constant 0 : i32
    %12 = vector.broadcast %c0_i32_3 : i32 to vector<1x512xi32>
    %13 = arith.cmpi sgt, %5, %12 : vector<1x512xi32>
    %c15_i32_4 = arith.constant 15 : i32
    %14 = vector.broadcast %c15_i32_4 : i32 to vector<1x512xi32>
    %15 = arith.cmpi slt, %5, %14 : vector<1x512xi32>
    %c0_5 = arith.constant 0 : index
    %c0_6 = arith.constant 0 : index
    %16 = vector.load %arg1[%c0_5, %c0_6] : memref<16x72xf32, #tpu.memory_space<vmem>>, vector<16x72xf32>
    %c17_i32 = arith.constant 17 : i32
    %17 = tpu.dynamic_rotate %0 by %c17_i32 dim 1 : vector<8x512xf32>, i32 -> vector<8x512xf32>
    %18 = arith.andi %9, %13 : vector<1x512xi1>
    %cst = arith.constant 0.000000e+00 : f32
    %19 = vector.shape_cast %18 : vector<1x512xi1> to vector<1x512xi1>
    %20 = vector.broadcast %19 : vector<1x512xi1> to vector<8x512xi1>
    %21 = vector.broadcast %cst : f32 to vector<8x512xf32>
    %22 = arith.select %20, %17, %21 : vector<8x512xi1>, vector<8x512xf32>
    %c16_i32 = arith.constant 16 : i32
    %23 = tpu.dynamic_rotate %0 by %c16_i32 dim 1 : vector<8x512xf32>, i32 -> vector<8x512xf32>
    %cst_7 = arith.constant 0.000000e+00 : f32
    %24 = vector.shape_cast %9 : vector<1x512xi1> to vector<1x512xi1>
    %25 = vector.broadcast %24 : vector<1x512xi1> to vector<8x512xi1>
    %26 = vector.broadcast %cst_7 : f32 to vector<8x512xf32>
    %27 = arith.select %25, %23, %26 : vector<8x512xi1>, vector<8x512xf32>
    %c15_i32_8 = arith.constant 15 : i32
    %28 = tpu.dynamic_rotate %0 by %c15_i32_8 dim 1 : vector<8x512xf32>, i32 -> vector<8x512xf32>
    %29 = arith.andi %9, %15 : vector<1x512xi1>
    %cst_9 = arith.constant 0.000000e+00 : f32
    %30 = vector.shape_cast %29 : vector<1x512xi1> to vector<1x512xi1>
    %31 = vector.broadcast %30 : vector<1x512xi1> to vector<8x512xi1>
    %32 = vector.broadcast %cst_9 : f32 to vector<8x512xf32>
    %33 = arith.select %31, %28, %32 : vector<8x512xi1>, vector<8x512xf32>
    %c1_i32 = arith.constant 1 : i32
    %34 = tpu.dynamic_rotate %0 by %c1_i32 dim 1 : vector<8x512xf32>, i32 -> vector<8x512xf32>
    %cst_10 = arith.constant 0.000000e+00 : f32
    %35 = vector.shape_cast %13 : vector<1x512xi1> to vector<1x512xi1>
    %36 = vector.broadcast %35 : vector<1x512xi1> to vector<8x512xi1>
    %37 = vector.broadcast %cst_10 : f32 to vector<8x512xf32>
    %38 = arith.select %36, %34, %37 : vector<8x512xi1>, vector<8x512xf32>
    %c511_i32 = arith.constant 511 : i32
    %39 = tpu.dynamic_rotate %0 by %c511_i32 dim 1 : vector<8x512xf32>, i32 -> vector<8x512xf32>
    %cst_11 = arith.constant 0.000000e+00 : f32
    %40 = vector.shape_cast %15 : vector<1x512xi1> to vector<1x512xi1>
    %41 = vector.broadcast %40 : vector<1x512xi1> to vector<8x512xi1>
    %42 = vector.broadcast %cst_11 : f32 to vector<8x512xf32>
    %43 = arith.select %41, %39, %42 : vector<8x512xi1>, vector<8x512xf32>
    %c497_i32 = arith.constant 497 : i32
    %44 = tpu.dynamic_rotate %0 by %c497_i32 dim 1 : vector<8x512xf32>, i32 -> vector<8x512xf32>
    %45 = arith.andi %11, %13 : vector<1x512xi1>
    %cst_12 = arith.constant 0.000000e+00 : f32
    %46 = vector.shape_cast %45 : vector<1x512xi1> to vector<1x512xi1>
    %47 = vector.broadcast %46 : vector<1x512xi1> to vector<8x512xi1>
    %48 = vector.broadcast %cst_12 : f32 to vector<8x512xf32>
    %49 = arith.select %47, %44, %48 : vector<8x512xi1>, vector<8x512xf32>
    %c496_i32 = arith.constant 496 : i32
    %50 = tpu.dynamic_rotate %0 by %c496_i32 dim 1 : vector<8x512xf32>, i32 -> vector<8x512xf32>
    %cst_13 = arith.constant 0.000000e+00 : f32
    %51 = vector.shape_cast %11 : vector<1x512xi1> to vector<1x512xi1>
    %52 = vector.broadcast %51 : vector<1x512xi1> to vector<8x512xi1>
    %53 = vector.broadcast %cst_13 : f32 to vector<8x512xf32>
    %54 = arith.select %52, %50, %53 : vector<8x512xi1>, vector<8x512xf32>
    %c495_i32 = arith.constant 495 : i32
    %55 = tpu.dynamic_rotate %0 by %c495_i32 dim 1 : vector<8x512xf32>, i32 -> vector<8x512xf32>
    %56 = arith.andi %11, %15 : vector<1x512xi1>
    %cst_14 = arith.constant 0.000000e+00 : f32
    %57 = vector.shape_cast %56 : vector<1x512xi1> to vector<1x512xi1>
    %58 = vector.broadcast %57 : vector<1x512xi1> to vector<8x512xi1>
    %59 = vector.broadcast %cst_14 : f32 to vector<8x512xf32>
    %60 = arith.select %58, %55, %59 : vector<8x512xi1>, vector<8x512xf32>
    %61 = tpu.concatenate %22, %27, %33, %38, %0, %43, %49, %54, %60 in 0 : vector<8x512xf32>, vector<8x512xf32>, vector<8x512xf32>, vector<8x512xf32>, vector<8x512xf32>, vector<8x512xf32>, vector<8x512xf32>, vector<8x512xf32>, vector<8x512xf32> -> vector<72x512xf32>
    %cst_15 = arith.constant dense<0.000000e+00> : vector<16x512xf32>
    %62 = tpu.matmul %16, %61, %cst_15 {dimension_numbers = #tpu.dot_dimension_numbers<[1], [0], [0], [1], [0, 0, 1, 1], [], []>} : vector<16x72xf32>, vector<72x512xf32>, vector<16x512xf32> -> vector<16x512xf32>
    %c0_16 = arith.constant 0 : index
    %c0_17 = arith.constant 0 : index
    %63 = vector.load %arg3[%c0_16, %c0_17] : memref<16x4xf32, #tpu.memory_space<vmem>>, vector<16x1xf32>
    %c0_18 = arith.constant 0 : index
    %c1 = arith.constant 1 : index
    %64 = vector.load %arg3[%c0_18, %c1] : memref<16x4xf32, #tpu.memory_space<vmem>>, vector<16x1xf32>
    %cst_19 = arith.constant dense<0.000000e+00> : vector<16xf32>
    %65 = vector.multi_reduction <add>, %62, %cst_19 [1] : vector<16x512xf32> to vector<16xf32>
    %66 = vector.shape_cast %65 : vector<16xf32> to vector<16x1xf32>
    %cst_20 = arith.constant 5.120000e+02 : f32
    %67 = vector.broadcast %cst_20 : f32 to vector<16x1xf32>
    %68 = arith.divf %66, %67 : vector<16x1xf32>
    %69 = vector.broadcast %68 : vector<16x1xf32> to vector<16x512xf32>
    %70 = arith.subf %62, %69 : vector<16x512xf32>
    %71 = arith.mulf %70, %70 : vector<16x512xf32>
    %cst_21 = arith.constant dense<0.000000e+00> : vector<16xf32>
    %72 = vector.multi_reduction <add>, %71, %cst_21 [1] : vector<16x512xf32> to vector<16xf32>
    %73 = vector.shape_cast %72 : vector<16xf32> to vector<16x1xf32>
    %cst_22 = arith.constant 5.120000e+02 : f32
    %74 = vector.broadcast %cst_22 : f32 to vector<16x1xf32>
    %75 = arith.divf %73, %74 : vector<16x1xf32>
    %cst_23 = arith.constant 9.99999974E-6 : f32
    %76 = vector.broadcast %cst_23 : f32 to vector<16x1xf32>
    %77 = arith.addf %75, %76 : vector<16x1xf32>
    %78 = math.rsqrt %77 : vector<16x1xf32>
    %79 = arith.mulf %63, %78 : vector<16x1xf32>
    %80 = arith.mulf %68, %79 : vector<16x1xf32>
    %81 = arith.subf %64, %80 : vector<16x1xf32>
    %82 = vector.broadcast %79 : vector<16x1xf32> to vector<16x512xf32>
    %83 = arith.mulf %62, %82 : vector<16x512xf32>
    %84 = vector.broadcast %81 : vector<16x1xf32> to vector<16x512xf32>
    %85 = arith.addf %83, %84 : vector<16x512xf32>
    %86 = vector.extract_strided_slice %85 {offsets = [0, 0], sizes = [8, 512], strides = [1, 1]} : vector<16x512xf32> to vector<8x512xf32>
    %cst_24 = arith.constant 0.000000e+00 : f32
    %87 = vector.broadcast %cst_24 : f32 to vector<8x512xf32>
    %88 = arith.cmpf ogt, %86, %87 : vector<8x512xf32>
    %cst_25 = arith.constant 0.00999999977 : f32
    %89 = vector.broadcast %cst_25 : f32 to vector<8x512xf32>
    %90 = arith.mulf %89, %86 : vector<8x512xf32>
    %91 = arith.select %88, %86, %90 : vector<8x512xi1>, vector<8x512xf32>
    %92 = vector.extract_strided_slice %85 {offsets = [8, 0], sizes = [8, 512], strides = [1, 1]} : vector<16x512xf32> to vector<8x512xf32>
    %c0_26 = arith.constant 0 : index
    %c0_27 = arith.constant 0 : index
    %93 = vector.load %arg2[%c0_26, %c0_27] : memref<8x72xf32, #tpu.memory_space<vmem>>, vector<8x72xf32>
    %c17_i32_28 = arith.constant 17 : i32
    %94 = tpu.dynamic_rotate %91 by %c17_i32_28 dim 1 : vector<8x512xf32>, i32 -> vector<8x512xf32>
    %95 = arith.andi %9, %13 : vector<1x512xi1>
    %cst_29 = arith.constant 0.000000e+00 : f32
    %96 = vector.shape_cast %95 : vector<1x512xi1> to vector<1x512xi1>
    %97 = vector.broadcast %96 : vector<1x512xi1> to vector<8x512xi1>
    %98 = vector.broadcast %cst_29 : f32 to vector<8x512xf32>
    %99 = arith.select %97, %94, %98 : vector<8x512xi1>, vector<8x512xf32>
    %c16_i32_30 = arith.constant 16 : i32
    %100 = tpu.dynamic_rotate %91 by %c16_i32_30 dim 1 : vector<8x512xf32>, i32 -> vector<8x512xf32>
    %cst_31 = arith.constant 0.000000e+00 : f32
    %101 = vector.shape_cast %9 : vector<1x512xi1> to vector<1x512xi1>
    %102 = vector.broadcast %101 : vector<1x512xi1> to vector<8x512xi1>
    %103 = vector.broadcast %cst_31 : f32 to vector<8x512xf32>
    %104 = arith.select %102, %100, %103 : vector<8x512xi1>, vector<8x512xf32>
    %c15_i32_32 = arith.constant 15 : i32
    %105 = tpu.dynamic_rotate %91 by %c15_i32_32 dim 1 : vector<8x512xf32>, i32 -> vector<8x512xf32>
    %106 = arith.andi %9, %15 : vector<1x512xi1>
    %cst_33 = arith.constant 0.000000e+00 : f32
    %107 = vector.shape_cast %106 : vector<1x512xi1> to vector<1x512xi1>
    %108 = vector.broadcast %107 : vector<1x512xi1> to vector<8x512xi1>
    %109 = vector.broadcast %cst_33 : f32 to vector<8x512xf32>
    %110 = arith.select %108, %105, %109 : vector<8x512xi1>, vector<8x512xf32>
    %c1_i32_34 = arith.constant 1 : i32
    %111 = tpu.dynamic_rotate %91 by %c1_i32_34 dim 1 : vector<8x512xf32>, i32 -> vector<8x512xf32>
    %cst_35 = arith.constant 0.000000e+00 : f32
    %112 = vector.shape_cast %13 : vector<1x512xi1> to vector<1x512xi1>
    %113 = vector.broadcast %112 : vector<1x512xi1> to vector<8x512xi1>
    %114 = vector.broadcast %cst_35 : f32 to vector<8x512xf32>
    %115 = arith.select %113, %111, %114 : vector<8x512xi1>, vector<8x512xf32>
    %c511_i32_36 = arith.constant 511 : i32
    %116 = tpu.dynamic_rotate %91 by %c511_i32_36 dim 1 : vector<8x512xf32>, i32 -> vector<8x512xf32>
    %cst_37 = arith.constant 0.000000e+00 : f32
    %117 = vector.shape_cast %15 : vector<1x512xi1> to vector<1x512xi1>
    %118 = vector.broadcast %117 : vector<1x512xi1> to vector<8x512xi1>
    %119 = vector.broadcast %cst_37 : f32 to vector<8x512xf32>
    %120 = arith.select %118, %116, %119 : vector<8x512xi1>, vector<8x512xf32>
    %c497_i32_38 = arith.constant 497 : i32
    %121 = tpu.dynamic_rotate %91 by %c497_i32_38 dim 1 : vector<8x512xf32>, i32 -> vector<8x512xf32>
    %122 = arith.andi %11, %13 : vector<1x512xi1>
    %cst_39 = arith.constant 0.000000e+00 : f32
    %123 = vector.shape_cast %122 : vector<1x512xi1> to vector<1x512xi1>
    %124 = vector.broadcast %123 : vector<1x512xi1> to vector<8x512xi1>
    %125 = vector.broadcast %cst_39 : f32 to vector<8x512xf32>
    %126 = arith.select %124, %121, %125 : vector<8x512xi1>, vector<8x512xf32>
    %c496_i32_40 = arith.constant 496 : i32
    %127 = tpu.dynamic_rotate %91 by %c496_i32_40 dim 1 : vector<8x512xf32>, i32 -> vector<8x512xf32>
    %cst_41 = arith.constant 0.000000e+00 : f32
    %128 = vector.shape_cast %11 : vector<1x512xi1> to vector<1x512xi1>
    %129 = vector.broadcast %128 : vector<1x512xi1> to vector<8x512xi1>
    %130 = vector.broadcast %cst_41 : f32 to vector<8x512xf32>
    %131 = arith.select %129, %127, %130 : vector<8x512xi1>, vector<8x512xf32>
    %c495_i32_42 = arith.constant 495 : i32
    %132 = tpu.dynamic_rotate %91 by %c495_i32_42 dim 1 : vector<8x512xf32>, i32 -> vector<8x512xf32>
    %133 = arith.andi %11, %15 : vector<1x512xi1>
    %cst_43 = arith.constant 0.000000e+00 : f32
    %134 = vector.shape_cast %133 : vector<1x512xi1> to vector<1x512xi1>
    %135 = vector.broadcast %134 : vector<1x512xi1> to vector<8x512xi1>
    %136 = vector.broadcast %cst_43 : f32 to vector<8x512xf32>
    %137 = arith.select %135, %132, %136 : vector<8x512xi1>, vector<8x512xf32>
    %138 = tpu.concatenate %99, %104, %110, %115, %91, %120, %126, %131, %137 in 0 : vector<8x512xf32>, vector<8x512xf32>, vector<8x512xf32>, vector<8x512xf32>, vector<8x512xf32>, vector<8x512xf32>, vector<8x512xf32>, vector<8x512xf32>, vector<8x512xf32> -> vector<72x512xf32>
    %cst_44 = arith.constant dense<0.000000e+00> : vector<8x512xf32>
    %139 = tpu.matmul %93, %138, %cst_44 {dimension_numbers = #tpu.dot_dimension_numbers<[1], [0], [0], [1], [0, 0, 1, 1], [], []>} : vector<8x72xf32>, vector<72x512xf32>, vector<8x512xf32> -> vector<8x512xf32>
    %c0_45 = arith.constant 0 : index
    %c2 = arith.constant 2 : index
    %140 = vector.load %arg3[%c0_45, %c2] : memref<16x4xf32, #tpu.memory_space<vmem>>, vector<8x1xf32>
    %c0_46 = arith.constant 0 : index
    %c3 = arith.constant 3 : index
    %141 = vector.load %arg3[%c0_46, %c3] : memref<16x4xf32, #tpu.memory_space<vmem>>, vector<8x1xf32>
    %cst_47 = arith.constant dense<0.000000e+00> : vector<8xf32>
    %142 = vector.multi_reduction <add>, %139, %cst_47 [1] : vector<8x512xf32> to vector<8xf32>
    %143 = vector.shape_cast %142 : vector<8xf32> to vector<8x1xf32>
    %cst_48 = arith.constant 5.120000e+02 : f32
    %144 = vector.broadcast %cst_48 : f32 to vector<8x1xf32>
    %145 = arith.divf %143, %144 : vector<8x1xf32>
    %146 = vector.broadcast %145 : vector<8x1xf32> to vector<8x512xf32>
    %147 = arith.subf %139, %146 : vector<8x512xf32>
    %148 = arith.mulf %147, %147 : vector<8x512xf32>
    %cst_49 = arith.constant dense<0.000000e+00> : vector<8xf32>
    %149 = vector.multi_reduction <add>, %148, %cst_49 [1] : vector<8x512xf32> to vector<8xf32>
    %150 = vector.shape_cast %149 : vector<8xf32> to vector<8x1xf32>
    %cst_50 = arith.constant 5.120000e+02 : f32
    %151 = vector.broadcast %cst_50 : f32 to vector<8x1xf32>
    %152 = arith.divf %150, %151 : vector<8x1xf32>
    %cst_51 = arith.constant 9.99999974E-6 : f32
    %153 = vector.broadcast %cst_51 : f32 to vector<8x1xf32>
    %154 = arith.addf %152, %153 : vector<8x1xf32>
    %155 = math.rsqrt %154 : vector<8x1xf32>
    %156 = arith.mulf %140, %155 : vector<8x1xf32>
    %157 = arith.mulf %145, %156 : vector<8x1xf32>
    %158 = arith.subf %141, %157 : vector<8x1xf32>
    %159 = vector.broadcast %156 : vector<8x1xf32> to vector<8x512xf32>
    %160 = arith.mulf %139, %159 : vector<8x512xf32>
    %161 = vector.broadcast %158 : vector<8x1xf32> to vector<8x512xf32>
    %162 = arith.addf %160, %161 : vector<8x512xf32>
    %163 = arith.addf %162, %92 : vector<8x512xf32>
    %c0_52 = arith.constant 0 : index
    %c0_53 = arith.constant 0 : index
    %164 = vector.load %arg4[%c0_52, %c0_53] : memref<8x512xf32, #tpu.memory_space<vmem>>, vector<8x512xf32>
    tpu.vector_store %arg4[%c0_52, %c0_53], %163 {strides = array<i32>} : memref<8x512xf32, #tpu.memory_space<vmem>>, vector<8x512xf32>,
    return
  }
}

</mosaic_0001>

<llo_original>
// kernel: residual_block.1
$region0: #{residual_block.1}
  #allocation0 [shape = 'u32[]', space=smem, size = 0x4, offset = 0x4, fixed_abs, tag = 'smem constant byte address 0x4 - core index']
  #allocation1 [shape = 'u32[144,128]{1,0:T(1,128)}', space=vmem, size = 0x12000, scoped, tag = 'internal scratch']
  %s0 = inlined_call_operand.vmem [shape: f32[8,512], index: 0, kind: input, shape index: {}]
  %s1 = inlined_call_operand.vmem [shape: f32[16,72], index: 1, kind: input, shape index: {}]
  %s2 = inlined_call_operand.vmem [shape: f32[8,72], index: 2, kind: input, shape index: {}]
  %s3 = inlined_call_operand.vmem [shape: f32[16,4], index: 3, kind: input, shape index: {}]
  %s4 = inlined_call_operand.vmem [shape: f32[8,512], index: 4, kind: output, shape index: {}]
  %s5 = sld [smem:[#allocation0]]
  $region26: #{residual_block.1} parent=0
    _
  %s7 = ssub.s32 1, %s5
  %s8 = scalar_select 0, %s7, %s5
  // Predicated region
  $region2: #{residual_block.1} parent=0 // pred_check
    _
  $region3: #{residual_block.1} parent=0 // pred_check_branch
    %10 = sbr.rel (0) target = $region5
  $region4: #{residual_block.1} parent=0 // pred_region
    _
  $region5: #{residual_block.1} parent=0 // pred_fallthru
    _
  // Predicated region
  $region6: #{residual_block.1} parent=0 // pred_check
    _
  $region7: #{residual_block.1} parent=0 // pred_check_branch
    %12 = sbr.rel (0) target = $region9
  $region8: #{residual_block.1} parent=0 // pred_region
    _
  $region9: #{residual_block.1} parent=0 // pred_fallthru
    _
  // Predicated region
  $region10: #{residual_block.1} parent=0 // pred_check
    _
  $region11: #{residual_block.1} parent=0 // pred_check_branch
    %14 = sbr.rel (0) target = $region13
  $region12: #{residual_block.1} parent=0 // pred_region
    _
  $region13: #{residual_block.1} parent=0 // pred_fallthru
    _
  // Predicated region
  $region14: #{residual_block.1} parent=0 // pred_check
    _
  $region15: #{residual_block.1} parent=0 // pred_check_branch
    %16 = sbr.rel (0) target = $region17
  $region16: #{residual_block.1} parent=0 // pred_region
    _
  $region17: #{residual_block.1} parent=0 // pred_fallthru
    _
  %v17 = vld [vmem:[%s0] sm:$0xff]
  %v18 = vld [vmem:[%s0 + $0x8] sm:$0xff]
  %v19 = vld [vmem:[%s0 + $0x10] sm:$0xff]
  %v20 = vld [vmem:[%s0 + $0x18] sm:$0xff]
  %v21 = vlaneseq
  %v22 = vand.u32 %v21, 127
  %v23 = vadd.s32 %v22, 128
  %v24 = vadd.s32 %v22, 256
  %v25 = vadd.s32 %v22, 384
  %v26 = vshra.s32 %v22, 4
  %v27 = vshra.s32 %v23, 4
  %v28 = vshra.s32 %v24, 4
  %v29 = vshra.s32 %v25, 4
  %v30 = vand.u32 %v22, 15
  %v31 = vand.u32 %v23, 15
  %v32 = vand.u32 %v24, 15
  %v33 = vand.u32 %v25, 15
  %v34 = vand.u32 %v26, 15
  %v35 = vand.u32 %v27, 15
  %v36 = vand.u32 %v28, 15
  %v37 = vand.u32 %v29, 15
  %vm38 = vcmp.gt.s32.totalorder %v34, 0
  %vm39 = vcmp.gt.s32.totalorder %v35, 0
  %vm40 = vcmp.gt.s32.totalorder %v36, 0
  %vm41 = vcmp.gt.s32.totalorder %v37, 0
  %vm42 = vcmp.lt.s32.totalorder %v34, 15
  %vm43 = vcmp.lt.s32.totalorder %v35, 15
  %vm44 = vcmp.lt.s32.totalorder %v36, 15
  %vm45 = vcmp.lt.s32.totalorder %v37, 15
  %vm46 = vcmp.gt.s32.totalorder %v30, 0
  %vm47 = vcmp.gt.s32.totalorder %v31, 0
  %vm48 = vcmp.gt.s32.totalorder %v32, 0
  %vm49 = vcmp.gt.s32.totalorder %v33, 0
  %vm50 = vcmp.lt.s32.totalorder %v30, 15
  %vm51 = vcmp.lt.s32.totalorder %v31, 15
  %vm52 = vcmp.lt.s32.totalorder %v32, 15
  %vm53 = vcmp.lt.s32.totalorder %v33, 15
  %v54 = vld [vmem:[%s1] sm:$0xff]
  %v55 = vld [vmem:[%s1 + $0x8] sm:$0xff]
  %56 = vrot.lane.b32.xlu0 %v17, 17
  %v57 = vpop.permute.xlu0 %56
  %58 = vrot.lane.b32.xlu0 %v18, 17
  %v59 = vpop.permute.xlu0 %58
  %60 = vrot.lane.b32.xlu0 %v19, 17
  %v61 = vpop.permute.xlu0 %60
  %62 = vrot.lane.b32.xlu0 %v20, 17
  %v63 = vpop.permute.xlu0 %62
  %vm64 = vcmp.lt.s32.totalorder %v22, 17
  %v65 = vsel %vm64, %v61, %v63
  %v66 = vsel %vm64, %v59, %v61
  %v67 = vsel %vm64, %v57, %v59
  %v68 = vsel %vm64, %v63, %v57
  %vm69 = vmand %vm38, %vm46
  %vm70 = vmand %vm39, %vm47
  %vm71 = vmand %vm40, %vm48
  %vm72 = vmand %vm41, %vm49
  %v73 = vsel %vm69, 1, 0
  %v74 = vsel %vm70, 1, 0
  %v75 = vsel %vm71, 1, 0
  %v76 = vsel %vm72, 1, 0
  %vm77 = vcmp.eq.s32.totalorder %v73, 1
  %vm78 = vcmp.eq.s32.totalorder %v74, 1
  %vm79 = vcmp.eq.s32.totalorder %v75, 1
  %vm80 = vcmp.eq.s32.totalorder %v76, 1
  %v81 = vsel %vm77, %v68, 0.0
  %v82 = vsel %vm78, %v67, 0.0
  %v83 = vsel %vm79, %v66, 0.0
  %v84 = vsel %vm80, %v65, 0.0
  %85 = vrot.lane.b32.xlu0 %v17, 16
  %v86 = vpop.permute.xlu0 %85
  %87 = vrot.lane.b32.xlu0 %v18, 16
  %v88 = vpop.permute.xlu0 %87
  %89 = vrot.lane.b32.xlu0 %v19, 16
  %v90 = vpop.permute.xlu0 %89
  %91 = vrot.lane.b32.xlu0 %v20, 16
  %v92 = vpop.permute.xlu0 %91
  %vm93 = vcmp.lt.s32.totalorder %v22, 16
  %v94 = vsel %vm93, %v90, %v92
  %v95 = vsel %vm93, %v88, %v90
  %v96 = vsel %vm93, %v86, %v88
  %v97 = vsel %vm93, %v92, %v86
  %v98 = vsel %vm38, 1, 0
  %v99 = vsel %vm39, 1, 0
  %v100 = vsel %vm40, 1, 0
  %v101 = vsel %vm41, 1, 0
  %vm102 = vcmp.eq.s32.totalorder %v98, 1
  %vm103 = vcmp.eq.s32.totalorder %v99, 1
  %vm104 = vcmp.eq.s32.totalorder %v100, 1
  %vm105 = vcmp.eq.s32.totalorder %v101, 1
  %v106 = vsel %vm102, %v97, 0.0
  %v107 = vsel %vm103, %v96, 0.0
  %v108 = vsel %vm104, %v95, 0.0
  %v109 = vsel %vm105, %v94, 0.0
  %110 = vrot.lane.b32.xlu0 %v17, 15
  %v111 = vpop.permute.xlu0 %110
  %112 = vrot.lane.b32.xlu0 %v18, 15
  %v113 = vpop.permute.xlu0 %112
  %114 = vrot.lane.b32.xlu0 %v19, 15
  %v115 = vpop.permute.xlu0 %114
  %116 = vrot.lane.b32.xlu0 %v20, 15
  %v117 = vpop.permute.xlu0 %116
  %vm118 = vcmp.lt.s32.totalorder %v22, 15
  %v119 = vsel %vm118, %v115, %v117
  %v120 = vsel %vm118, %v113, %v115
  %v121 = vsel %vm118, %v111, %v113
  %v122 = vsel %vm118, %v117, %v111
  %vm123 = vmand %vm38, %vm50
  %vm124 = vmand %vm39, %vm51
  %vm125 = vmand %vm40, %vm52
  %vm126 = vmand %vm41, %vm53
  %v127 = vsel %vm123, 1, 0
  %v128 = vsel %vm124, 1, 0
  %v129 = vsel %vm125, 1, 0
  %v130 = vsel %vm126, 1, 0
  %vm131 = vcmp.eq.s32.totalorder %v127, 1
  %vm132 = vcmp.eq.s32.totalorder %v128, 1
  %vm133 = vcmp.eq.s32.totalorder %v129, 1
  %vm134 = vcmp.eq.s32.totalorder %v130, 1
  %v135 = vsel %vm131, %v122, 0.0
  %v136 = vsel %vm132, %v121, 0.0
  %v137 = vsel %vm133, %v120, 0.0
  %v138 = vsel %vm134, %v119, 0.0
  %139 = vrot.lane.b32.xlu0 %v17, 1
  %v140 = vpop.permute.xlu0 %139
  %141 = vrot.lane.b32.xlu0 %v18, 1
  %v142 = vpop.permute.xlu0 %141
  %143 = vrot.lane.b32.xlu0 %v19, 1
  %v144 = vpop.permute.xlu0 %143
  %145 = vrot.lane.b32.xlu0 %v20, 1
  %v146 = vpop.permute.xlu0 %145
  %vm147 = vcmp.lt.s32.totalorder %v22, 1
  %v148 = vsel %vm147, %v144, %v146
  %v149 = vsel %vm147, %v142, %v144
  %v150 = vsel %vm147, %v140, %v142
  %v151 = vsel %vm147, %v146, %v140
  %v152 = vsel %vm46, 1, 0
  %v153 = vsel %vm47, 1, 0
  %v154 = vsel %vm48, 1, 0
  %v155 = vsel %vm49, 1, 0
  %vm156 = vcmp.eq.s32.totalorder %v152, 1
  %vm157 = vcmp.eq.s32.totalorder %v153, 1
  %vm158 = vcmp.eq.s32.totalorder %v154, 1
  %vm159 = vcmp.eq.s32.totalorder %v155, 1
  %v160 = vsel %vm156, %v151, 0.0
  %v161 = vsel %vm157, %v150, 0.0
  %v162 = vsel %vm158, %v149, 0.0
  %v163 = vsel %vm159, %v148, 0.0
  %164 = vrot.lane.b32.xlu0 %v17, 127
  %v165 = vpop.permute.xlu0 %164
  %166 = vrot.lane.b32.xlu0 %v18, 127
  %v167 = vpop.permute.xlu0 %166
  %168 = vrot.lane.b32.xlu0 %v19, 127
  %v169 = vpop.permute.xlu0 %168
  %170 = vrot.lane.b32.xlu0 %v20, 127
  %v171 = vpop.permute.xlu0 %170
  %vm172 = vcmp.lt.s32.totalorder %v22, 127
  %v173 = vsel %vm172, %v169, %v171
  %v174 = vsel %vm172, %v167, %v169
  %v175 = vsel %vm172, %v165, %v167
  %v176 = vsel %vm172, %v171, %v165
  %v177 = vsel %vm50, 1, 0
  %v178 = vsel %vm51, 1, 0
  %v179 = vsel %vm52, 1, 0
  %v180 = vsel %vm53, 1, 0
  %vm181 = vcmp.eq.s32.totalorder %v177, 1
  %vm182 = vcmp.eq.s32.totalorder %v178, 1
  %vm183 = vcmp.eq.s32.totalorder %v179, 1
  %vm184 = vcmp.eq.s32.totalorder %v180, 1
  %v185 = vsel %vm181, %v175, 0.0
  %v186 = vsel %vm182, %v174, 0.0
  %v187 = vsel %vm183, %v173, 0.0
  %v188 = vsel %vm184, %v176, 0.0
  %189 = vrot.lane.b32.xlu0 %v17, 113
  %v190 = vpop.permute.xlu0 %189
  %191 = vrot.lane.b32.xlu0 %v18, 113
  %v192 = vpop.permute.xlu0 %191
  %193 = vrot.lane.b32.xlu0 %v19, 113
  %v194 = vpop.permute.xlu0 %193
  %195 = vrot.lane.b32.xlu0 %v20, 113
  %v196 = vpop.permute.xlu0 %195
  %vm197 = vcmp.lt.s32.totalorder %v22, 113
  %v198 = vsel %vm197, %v194, %v196
  %v199 = vsel %vm197, %v192, %v194
  %v200 = vsel %vm197, %v190, %v192
  %v201 = vsel %vm197, %v196, %v190
  %vm202 = vmand %vm42, %vm46
  %vm203 = vmand %vm43, %vm47
  %vm204 = vmand %vm44, %vm48
  %vm205 = vmand %vm45, %vm49
  %v206 = vsel %vm202, 1, 0
  %v207 = vsel %vm203, 1, 0
  %v208 = vsel %vm204, 1, 0
  %v209 = vsel %vm205, 1, 0
  %vm210 = vcmp.eq.s32.totalorder %v206, 1
  %vm211 = vcmp.eq.s32.totalorder %v207, 1
  %vm212 = vcmp.eq.s32.totalorder %v208, 1
  %vm213 = vcmp.eq.s32.totalorder %v209, 1
  %v214 = vsel %vm210, %v200, 0.0
  %v215 = vsel %vm211, %v199, 0.0
  %v216 = vsel %vm212, %v198, 0.0
  %v217 = vsel %vm213, %v201, 0.0
  %218 = vrot.lane.b32.xlu0 %v17, 112
  %v219 = vpop.permute.xlu0 %218
  %220 = vrot.lane.b32.xlu0 %v18, 112
  %v221 = vpop.permute.xlu0 %220
  %222 = vrot.lane.b32.xlu0 %v19, 112
  %v223 = vpop.permute.xlu0 %222
  %224 = vrot.lane.b32.xlu0 %v20, 112
  %v225 = vpop.permute.xlu0 %224
  %vm226 = vcmp.lt.s32.totalorder %v22, 112
  %v227 = vsel %vm226, %v223, %v225
  %v228 = vsel %vm226, %v221, %v223
  %v229 = vsel %vm226, %v219, %v221
  %v230 = vsel %vm226, %v225, %v219
  %v231 = vsel %vm42, 1, 0
  %v232 = vsel %vm43, 1, 0
  %v233 = vsel %vm44, 1, 0
  %v234 = vsel %vm45, 1, 0
  %vm235 = vcmp.eq.s32.totalorder %v231, 1
  %vm236 = vcmp.eq.s32.totalorder %v232, 1
  %vm237 = vcmp.eq.s32.totalorder %v233, 1
  %vm238 = vcmp.eq.s32.totalorder %v234, 1
  %v239 = vsel %vm235, %v229, 0.0
  %v240 = vsel %vm236, %v228, 0.0
  %v241 = vsel %vm237, %v227, 0.0
  %v242 = vsel %vm238, %v230, 0.0
  %243 = vrot.lane.b32.xlu0 %v17, 111
  %v244 = vpop.permute.xlu0 %243
  %245 = vrot.lane.b32.xlu0 %v18, 111
  %v246 = vpop.permute.xlu0 %245
  %247 = vrot.lane.b32.xlu0 %v19, 111
  %v248 = vpop.permute.xlu0 %247
  %249 = vrot.lane.b32.xlu0 %v20, 111
  %v250 = vpop.permute.xlu0 %249
  %vm251 = vcmp.lt.s32.totalorder %v22, 111
  %v252 = vsel %vm251, %v248, %v250
  %v253 = vsel %vm251, %v246, %v248
  %v254 = vsel %vm251, %v244, %v246
  %v255 = vsel %vm251, %v250, %v244
  %vm256 = vmand %vm42, %vm50
  %vm257 = vmand %vm43, %vm51
  %vm258 = vmand %vm44, %vm52
  %vm259 = vmand %vm45, %vm53
  %v260 = vsel %vm256, 1, 0
  %v261 = vsel %vm257, 1, 0
  %v262 = vsel %vm258, 1, 0
  %v263 = vsel %vm259, 1, 0
  %vm264 = vcmp.eq.s32.totalorder %v260, 1
  %vm265 = vcmp.eq.s32.totalorder %v261, 1
  %vm266 = vcmp.eq.s32.totalorder %v262, 1
  %vm267 = vcmp.eq.s32.totalorder %v263, 1
  %v268 = vsel %vm264, %v254, 0.0
  %v269 = vsel %vm265, %v253, 0.0
  %v270 = vsel %vm266, %v252, 0.0
  %v271 = vsel %vm267, %v255, 0.0
  %vm272 = vcmask 588800
  %v274 = vsel %vm272, %v54, 0
  %v277 = vsel %vm272, %v55, 0
  %279 = vmatprep.subr.mxu0 %v82
  %280 = vmatpush1.msra.mxu0 %v81
  %281 = vmatprep.subr.mxu0 %v107
  %282 = vmatpush1.msra.mxu0 %v106
  %283 = vmatprep.subr.mxu0 %v136
  %284 = vmatpush1.msra.mxu0 %v135
  %285 = vmatprep.subr.mxu0 %v161
  %286 = vmatpush1.msra.mxu0 %v160
  %287 = vmatprep.subr.mxu0 %v18
  %288 = vmatpush1.msra.mxu0 %v17
  %289 = vmatprep.subr.mxu0 %v186
  %290 = vmatpush1.msra.mxu0 %v185
  %291 = vmatprep.subr.mxu0 %v215
  %292 = vmatpush1.msra.mxu0 %v214
  %293 = vmatprep.subr.mxu0 %v240
  %294 = vmatpush1.msra.mxu0 %v239
  %295 = vmatprep.subr.mxu0 %v269
  %296 = vmatpush1.msra.mxu0 %v268
  %297 = vmatprep.subr.mxu0 0.0
  %298 = vmatpush1.msra.mxu0 0.0
  %299 = vmatprep.subr.mxu0 0.0
  %300 = vmatpush1.msra.mxu0 0.0
  %301 = vmatprep.subr.mxu0 0.0
  %302 = vmatpush1.msra.mxu0 0.0
  %303 = vmatprep.subr.mxu0 0.0
  %304 = vmatpush1.msra.mxu0 0.0
  %305 = vmatprep.subr.mxu0 0.0
  %306 = vmatpush1.msra.mxu0 0.0
  %307 = vmatprep.subr.mxu0 0.0
  %308 = vmatpush1.msra.mxu0 0.0
  %309 = vmatprep.subr.mxu0 0.0
  %310 = vmatpush1.msra.mxu0 0.0
  %311 = vmatprep.subr.mxu0 0.0
  %312 = vmatpush1.msra.mxu0 0.0
  %313 = vmatprep.subr.mxu0 0.0
  %314 = vmatpush1.msra.mxu0 0.0
  %315 = vmatprep.subr.mxu0 0.0
  %316 = vmatpush1.msra.mxu0 0.0
  %317 = vmatprep.subr.mxu0 0.0
  %318 = vmatpush1.msra.mxu0 0.0
  %319 = vmatprep.subr.mxu0 0.0
  %320 = vmatpush1.msra.mxu0 0.0
  %321 = vmatprep.subr.mxu0 0.0
  %322 = vmatpush1.msra.mxu0 0.0
  %323 = vmatprep.subr.mxu0 0.0
  %324 = vmatpush1.msra.mxu0 0.0
  %325 = vmatprep.subr.mxu0 0.0
  %326 = vmatpush1.msra.mxu0 0.0
  %327 = vmatprep.subr.mxu0 0.0
  %328 = vmatpush1.msra.mxu0 0.0
  %329 = vmatprep.subr.mxu0 0.0
  %330 = vmatpush1.msra.mxu0 0.0
  %331 = vmatprep.subr.mxu0 0.0
  %332 = vmatpush1.msra.mxu0 0.0
  %333 = vmatprep.subr.mxu0 0.0
  %334 = vmatpush1.msra.mxu0 0.0
  %335 = vmatprep.subr.mxu0 0.0
  %336 = vmatpush1.msra.mxu0 0.0
  %337 = vmatprep.subr.mxu0 0.0
  %338 = vmatpush1.msra.mxu0 0.0
  %339 = vmatprep.subr.mxu0 0.0
  %340 = vmatpush1.msra.mxu0 0.0
  %341 = vmatprep.subr.mxu0 0.0
  %342 = vmatpush1.msra.mxu0 0.0
  %343 = vmatprep.mubr.f32.mxu0 0.0
  %344 = vmatmul.mubr.f32.gmra.mrb[0].mxu0 %v274
  %v345 = vpop.f32.mrb[0].mxu0
  %v346 = vadd.f32 0.0, %v345
  %v347 = vpop.f32.mrb[0].mxu0
  %v348 = vadd.f32 0.0, %v347
  %349 = vmatprep.mubr.f32.mxu0 0.0
  %350 = vmatmul.mubr.f32.gmra.mrb[0].mxu0 %v277
  %v351 = vpop.f32.mrb[0].mxu0
  %v352 = vadd.f32 0.0, %v351
  %v353 = vpop.f32.mrb[0].mxu0
  %v354 = vadd.f32 0.0, %v353
  %355 = vdwg.mxu0
  %356 = vmatprep.subr.mxu0 %v84
  %357 = vmatpush1.msra.mxu0 %v83
  %358 = vmatprep.subr.mxu0 %v109
  %359 = vmatpush1.msra.mxu0 %v108
  %360 = vmatprep.subr.mxu0 %v138
  %361 = vmatpush1.msra.mxu0 %v137
  %362 = vmatprep.subr.mxu0 %v163
  %363 = vmatpush1.msra.mxu0 %v162
  %364 = vmatprep.subr.mxu0 %v20
  %365 = vmatpush1.msra.mxu0 %v19
  %366 = vmatprep.subr.mxu0 %v188
  %367 = vmatpush1.msra.mxu0 %v187
  %368 = vmatprep.subr.mxu0 %v217
  %369 = vmatpush1.msra.mxu0 %v216
  %370 = vmatprep.subr.mxu0 %v242
  %371 = vmatpush1.msra.mxu0 %v241
  %372 = vmatprep.subr.mxu0 %v271
  %373 = vmatpush1.msra.mxu0 %v270
  %374 = vmatprep.subr.mxu0 0.0
  %375 = vmatpush1.msra.mxu0 0.0
  %376 = vmatprep.subr.mxu0 0.0
  %377 = vmatpush1.msra.mxu0 0.0
  %378 = vmatprep.subr.mxu0 0.0
  %379 = vmatpush1.msra.mxu0 0.0
  %380 = vmatprep.subr.mxu0 0.0
  %381 = vmatpush1.msra.mxu0 0.0
  %382 = vmatprep.subr.mxu0 0.0
  %383 = vmatpush1.msra.mxu0 0.0
  %384 = vmatprep.subr.mxu0 0.0
  %385 = vmatpush1.msra.mxu0 0.0
  %386 = vmatprep.subr.mxu0 0.0
  %387 = vmatpush1.msra.mxu0 0.0
  %388 = vmatprep.subr.mxu0 0.0
  %389 = vmatpush1.msra.mxu0 0.0
  %390 = vmatprep.subr.mxu0 0.0
  %391 = vmatpush1.msra.mxu0 0.0
  %392 = vmatprep.subr.mxu0 0.0
  %393 = vmatpush1.msra.mxu0 0.0
  %394 = vmatprep.subr.mxu0 0.0
  %395 = vmatpush1.msra.mxu0 0.0
  %396 = vmatprep.subr.mxu0 0.0
  %397 = vmatpush1.msra.mxu0 0.0
  %398 = vmatprep.subr.mxu0 0.0
  %399 = vmatpush1.msra.mxu0 0.0
  %400 = vmatprep.subr.mxu0 0.0
  %401 = vmatpush1.msra.mxu0 0.0
  %402 = vmatprep.subr.mxu0 0.0
  %403 = vmatpush1.msra.mxu0 0.0
  %404 = vmatprep.subr.mxu0 0.0
  %405 = vmatpush1.msra.mxu0 0.0
  %406 = vmatprep.subr.mxu0 0.0
  %407 = vmatpush1.msra.mxu0 0.0
  %408 = vmatprep.subr.mxu0 0.0
  %409 = vmatpush1.msra.mxu0 0.0
  %410 = vmatprep.subr.mxu0 0.0
  %411 = vmatpush1.msra.mxu0 0.0
  %412 = vmatprep.subr.mxu0 0.0
  %413 = vmatpush1.msra.mxu0 0.0
  %414 = vmatprep.subr.mxu0 0.0
  %415 = vmatpush1.msra.mxu0 0.0
  %416 = vmatprep.subr.mxu0 0.0
  %417 = vmatpush1.msra.mxu0 0.0
  %418 = vmatprep.subr.mxu0 0.0
  %419 = vmatpush1.msra.mxu0 0.0
  %420 = vmatprep.mubr.f32.mxu0 0.0
  %421 = vmatmul.mubr.f32.gmra.mrb[0].mxu0 %v274
  %v422 = vpop.f32.mrb[0].mxu0
  %v423 = vadd.f32 0.0, %v422
  %v424 = vpop.f32.mrb[0].mxu0
  %v425 = vadd.f32 0.0, %v424
  %426 = vmatprep.mubr.f32.mxu0 0.0
  %427 = vmatmul.mubr.f32.gmra.mrb[0].mxu0 %v277
  %v428 = vpop.f32.mrb[0].mxu0
  %v429 = vadd.f32 0.0, %v428
  %v430 = vpop.f32.mrb[0].mxu0
  %v431 = vadd.f32 0.0, %v430
  %432 = vdwg.mxu0
  %v433 = vld [vmem:[%s3] sm:$0xff]
  %v434 = vld [vmem:[%s3 + $0x8] sm:$0xff]
  %v435 = vadd.f32 %v346, %v348
  %v436 = vadd.f32 %v435, %v423
  %v437 = vadd.f32 %v436, %v425
  %438 = vadd.xlane.f32.xlu0 %v437
  %v439 = vpop.xlane.xlu0 %438
  %v440 = vadd.f32 %v352, %v354
  %v441 = vadd.f32 %v440, %v429
  %v442 = vadd.f32 %v441, %v431
  %443 = vadd.xlane.f32.xlu0 %v442
  %v444 = vpop.xlane.xlu0 %443
  %v445 = vrcp.pop 512.0
  %v446 = vmul.f32 %v439, %v445
  %v447 = vmul.f32 %v444, %v445
  %v448 = vsub.f32 %v346, %v446
  %v449 = vsub.f32 %v348, %v446
  %v450 = vsub.f32 %v423, %v446
  %v451 = vsub.f32 %v425, %v446
  %v452 = vsub.f32 %v352, %v447
  %v453 = vsub.f32 %v354, %v447
  %v454 = vsub.f32 %v429, %v447
  %v455 = vsub.f32 %v431, %v447
  %v456 = vmul.f32 %v448, %v448
  %v457 = vmul.f32 %v449, %v449
  %v458 = vmul.f32 %v450, %v450
  %v459 = vmul.f32 %v451, %v451
  %v460 = vmul.f32 %v452, %v452
  %v461 = vmul.f32 %v453, %v453
  %v462 = vmul.f32 %v454, %v454
  %v463 = vmul.f32 %v455, %v455
  %v464 = vadd.f32 %v456, %v457
  %v465 = vadd.f32 %v464, %v458
  %v466 = vadd.f32 %v465, %v459
  %467 = vadd.xlane.f32.xlu0 %v466
  %v468 = vpop.xlane.xlu0 %467
  %v469 = vadd.f32 %v460, %v461
  %v470 = vadd.f32 %v469, %v462
  %v471 = vadd.f32 %v470, %v463
  %472 = vadd.xlane.f32.xlu0 %v471
  %v473 = vpop.xlane.xlu0 %472
  %v474 = vmul.f32 %v468, %v445
  %v475 = vmul.f32 %v473, %v445
  %v476 = vadd.f32 %v474, 1e-05
  %v477 = vadd.f32 %v475, 1e-05
  %v478 = vrsqrt.pop %v476
  %v479 = vrsqrt.pop %v477
  %v480 = vmul.f32 %v433, %v478
  %v481 = vmul.f32 %v434, %v479
  %v482 = vmul.f32 %v446, %v480
  %v483 = vmul.f32 %v447, %v481
  %486 = vrot.lane.b32.xlu0 %v482, 1
  %v487 = vpop.permute.xlu0 %486
  %488 = vrot.lane.b32.xlu0 %v483, 1
  %v489 = vpop.permute.xlu0 %488
  %v492 = vsub.f32 %v433, %v487
  %v493 = vsub.f32 %v434, %v489
  %495 = vset.pattern.permute.xlu0 0
  %496 = vperm.xlu0 %495, %v480
  %v497 = vpop.permute.xlu0 %496
  %500 = vset.pattern.permute.xlu0 0
  %501 = vperm.xlu0 %500, %v481
  %v502 = vpop.permute.xlu0 %501
  %v504 = vmul.f32 %v346, %v497
  %v505 = vmul.f32 %v348, %v497
  %v506 = vmul.f32 %v423, %v497
  %v507 = vmul.f32 %v425, %v497
  %v508 = vmul.f32 %v352, %v502
  %v509 = vmul.f32 %v354, %v502
  %v510 = vmul.f32 %v429, %v502
  %v511 = vmul.f32 %v431, %v502
  %513 = vset.pattern.permute.xlu0 1
  %514 = vperm.xlu0 %513, %v492
  %v515 = vpop.permute.xlu0 %514
  %518 = vset.pattern.permute.xlu0 1
  %519 = vperm.xlu0 %518, %v493
  %v520 = vpop.permute.xlu0 %519
  %v522 = vadd.f32 %v504, %v515
  %v523 = vadd.f32 %v505, %v515
  %v524 = vadd.f32 %v506, %v515
  %v525 = vadd.f32 %v507, %v515
  %v526 = vadd.f32 %v508, %v520
  %v527 = vadd.f32 %v509, %v520
  %v528 = vadd.f32 %v510, %v520
  %v529 = vadd.f32 %v511, %v520
  %vm530 = vcmp.gt.f32.partialorder %v522, 0.0
  %vm531 = vcmp.gt.f32.partialorder %v523, 0.0
  %vm532 = vcmp.gt.f32.partialorder %v524, 0.0
  %vm533 = vcmp.gt.f32.partialorder %v525, 0.0
  %v534 = vmul.f32 %v522, 0.01
  %v535 = vmul.f32 %v523, 0.01
  %v536 = vmul.f32 %v524, 0.01
  %v537 = vmul.f32 %v525, 0.01
  %v538 = vsel %vm530, %v522, %v534
  %v539 = vsel %vm531, %v523, %v535
  %v540 = vsel %vm532, %v524, %v536
  %v541 = vsel %vm533, %v525, %v537
  %v542 = vld [vmem:[%s2] sm:$0xff]
  %543 = vrot.lane.b32.xlu0 %v538, 17
  %v544 = vpop.permute.xlu0 %543
  %545 = vrot.lane.b32.xlu0 %v539, 17
  %v546 = vpop.permute.xlu0 %545
  %547 = vrot.lane.b32.xlu0 %v540, 17
  %v548 = vpop.permute.xlu0 %547
  %549 = vrot.lane.b32.xlu0 %v541, 17
  %v550 = vpop.permute.xlu0 %549
  %v551 = vsel %vm64, %v548, %v550
  %v552 = vsel %vm64, %v546, %v548
  %v553 = vsel %vm64, %v544, %v546
  %v554 = vsel %vm64, %v550, %v544
  %v555 = vsel %vm77, %v554, 0.0
  %v556 = vsel %vm78, %v553, 0.0
  %v557 = vsel %vm79, %v552, 0.0
  %v558 = vsel %vm80, %v551, 0.0
  %559 = vrot.lane.b32.xlu0 %v538, 16
  %v560 = vpop.permute.xlu0 %559
  %561 = vrot.lane.b32.xlu0 %v539, 16
  %v562 = vpop.permute.xlu0 %561
  %563 = vrot.lane.b32.xlu0 %v540, 16
  %v564 = vpop.permute.xlu0 %563
  %565 = vrot.lane.b32.xlu0 %v541, 16
  %v566 = vpop.permute.xlu0 %565
  %v567 = vsel %vm93, %v564, %v566
  %v568 = vsel %vm93, %v562, %v564
  %v569 = vsel %vm93, %v560, %v562
  %v570 = vsel %vm93, %v566, %v560
  %v571 = vsel %vm102, %v570, 0.0
  %v572 = vsel %vm103, %v569, 0.0
  %v573 = vsel %vm104, %v568, 0.0
  %v574 = vsel %vm105, %v567, 0.0
  %575 = vrot.lane.b32.xlu0 %v538, 15
  %v576 = vpop.permute.xlu0 %575
  %577 = vrot.lane.b32.xlu0 %v539, 15
  %v578 = vpop.permute.xlu0 %577
  %579 = vrot.lane.b32.xlu0 %v540, 15
  %v580 = vpop.permute.xlu0 %579
  %581 = vrot.lane.b32.xlu0 %v541, 15
  %v582 = vpop.permute.xlu0 %581
  %v583 = vsel %vm118, %v580, %v582
  %v584 = vsel %vm118, %v578, %v580
  %v585 = vsel %vm118, %v576, %v578
  %v586 = vsel %vm118, %v582, %v576
  %v587 = vsel %vm131, %v586, 0.0
  %v588 = vsel %vm132, %v585, 0.0
  %v589 = vsel %vm133, %v584, 0.0
  %v590 = vsel %vm134, %v583, 0.0
  %591 = vrot.lane.b32.xlu0 %v538, 1
  %v592 = vpop.permute.xlu0 %591
  %593 = vrot.lane.b32.xlu0 %v539, 1
  %v594 = vpop.permute.xlu0 %593
  %595 = vrot.lane.b32.xlu0 %v540, 1
  %v596 = vpop.permute.xlu0 %595
  %597 = vrot.lane.b32.xlu0 %v541, 1
  %v598 = vpop.permute.xlu0 %597
  %v599 = vsel %vm147, %v596, %v598
  %v600 = vsel %vm147, %v594, %v596
  %v601 = vsel %vm147, %v592, %v594
  %v602 = vsel %vm147, %v598, %v592
  %v603 = vsel %vm156, %v602, 0.0
  %v604 = vsel %vm157, %v601, 0.0
  %v605 = vsel %vm158, %v600, 0.0
  %v606 = vsel %vm159, %v599, 0.0
  %607 = vrot.lane.b32.xlu0 %v538, 127
  %v608 = vpop.permute.xlu0 %607
  %609 = vrot.lane.b32.xlu0 %v539, 127
  %v610 = vpop.permute.xlu0 %609
  %611 = vrot.lane.b32.xlu0 %v540, 127
  %v612 = vpop.permute.xlu0 %611
  %613 = vrot.lane.b32.xlu0 %v541, 127
  %v614 = vpop.permute.xlu0 %613
  %v615 = vsel %vm172, %v612, %v614
  %v616 = vsel %vm172, %v610, %v612
  %v617 = vsel %vm172, %v608, %v610
  %v618 = vsel %vm172, %v614, %v608
  %v619 = vsel %vm181, %v617, 0.0
  %v620 = vsel %vm182, %v616, 0.0
  %v621 = vsel %vm183, %v615, 0.0
  %v622 = vsel %vm184, %v618, 0.0
  %623 = vrot.lane.b32.xlu0 %v538, 113
  %v624 = vpop.permute.xlu0 %623
  %625 = vrot.lane.b32.xlu0 %v539, 113
  %v626 = vpop.permute.xlu0 %625
  %627 = vrot.lane.b32.xlu0 %v540, 113
  %v628 = vpop.permute.xlu0 %627
  %629 = vrot.lane.b32.xlu0 %v541, 113
  %v630 = vpop.permute.xlu0 %629
  %v631 = vsel %vm197, %v628, %v630
  %v632 = vsel %vm197, %v626, %v628
  %v633 = vsel %vm197, %v624, %v626
  %v634 = vsel %vm197, %v630, %v624
  %v635 = vsel %vm210, %v633, 0.0
  %v636 = vsel %vm211, %v632, 0.0
  %v637 = vsel %vm212, %v631, 0.0
  %v638 = vsel %vm213, %v634, 0.0
  %639 = vrot.lane.b32.xlu0 %v538, 112
  %v640 = vpop.permute.xlu0 %639
  %641 = vrot.lane.b32.xlu0 %v539, 112
  %v642 = vpop.permute.xlu0 %641
  %643 = vrot.lane.b32.xlu0 %v540, 112
  %v644 = vpop.permute.xlu0 %643
  %645 = vrot.lane.b32.xlu0 %v541, 112
  %v646 = vpop.permute.xlu0 %645
  %v647 = vsel %vm226, %v644, %v646
  %v648 = vsel %vm226, %v642, %v644
  %v649 = vsel %vm226, %v640, %v642
  %v650 = vsel %vm226, %v646, %v640
  %v651 = vsel %vm235, %v649, 0.0
  %v652 = vsel %vm236, %v648, 0.0
  %v653 = vsel %vm237, %v647, 0.0
  %v654 = vsel %vm238, %v650, 0.0
  %655 = vrot.lane.b32.xlu0 %v538, 111
  %v656 = vpop.permute.xlu0 %655
  %657 = vrot.lane.b32.xlu0 %v539, 111
  %v658 = vpop.permute.xlu0 %657
  %659 = vrot.lane.b32.xlu0 %v540, 111
  %v660 = vpop.permute.xlu0 %659
  %661 = vrot.lane.b32.xlu0 %v541, 111
  %v662 = vpop.permute.xlu0 %661
  %v663 = vsel %vm251, %v660, %v662
  %v664 = vsel %vm251, %v658, %v660
  %v665 = vsel %vm251, %v656, %v658
  %v666 = vsel %vm251, %v662, %v656
  %v667 = vsel %vm264, %v665, 0.0
  %v668 = vsel %vm265, %v664, 0.0
  %v669 = vsel %vm266, %v663, 0.0
  %v670 = vsel %vm267, %v666, 0.0
  %v672 = vsel %vm272, %v542, 0
  %674 = vmatprep.subr.mxu0 %v556
  %675 = vmatpush1.msra.mxu0 %v555
  %676 = vmatprep.subr.mxu0 %v572
  %677 = vmatpush1.msra.mxu0 %v571
  %678 = vmatprep.subr.mxu0 %v588
  %679 = vmatpush1.msra.mxu0 %v587
  %680 = vmatprep.subr.mxu0 %v604
  %681 = vmatpush1.msra.mxu0 %v603
  %682 = vmatprep.subr.mxu0 %v539
  %683 = vmatpush1.msra.mxu0 %v538
  %684 = vmatprep.subr.mxu0 %v620
  %685 = vmatpush1.msra.mxu0 %v619
  %686 = vmatprep.subr.mxu0 %v636
  %687 = vmatpush1.msra.mxu0 %v635
  %688 = vmatprep.subr.mxu0 %v652
  %689 = vmatpush1.msra.mxu0 %v651
  %690 = vmatprep.subr.mxu0 %v668
  %691 = vmatpush1.msra.mxu0 %v667
  %692 = vmatprep.subr.mxu0 0.0
  %693 = vmatpush1.msra.mxu0 0.0
  %694 = vmatprep.subr.mxu0 0.0
  %695 = vmatpush1.msra.mxu0 0.0
  %696 = vmatprep.subr.mxu0 0.0
  %697 = vmatpush1.msra.mxu0 0.0
  %698 = vmatprep.subr.mxu0 0.0
  %699 = vmatpush1.msra.mxu0 0.0
  %700 = vmatprep.subr.mxu0 0.0
  %701 = vmatpush1.msra.mxu0 0.0
  %702 = vmatprep.subr.mxu0 0.0
  %703 = vmatpush1.msra.mxu0 0.0
  %704 = vmatprep.subr.mxu0 0.0
  %705 = vmatpush1.msra.mxu0 0.0
  %706 = vmatprep.subr.mxu0 0.0
  %707 = vmatpush1.msra.mxu0 0.0
  %708 = vmatprep.subr.mxu0 0.0
  %709 = vmatpush1.msra.mxu0 0.0
  %710 = vmatprep.subr.mxu0 0.0
  %711 = vmatpush1.msra.mxu0 0.0
  %712 = vmatprep.subr.mxu0 0.0
  %713 = vmatpush1.msra.mxu0 0.0
  %714 = vmatprep.subr.mxu0 0.0
  %715 = vmatpush1.msra.mxu0 0.0
  %716 = vmatprep.subr.mxu0 0.0
  %717 = vmatpush1.msra.mxu0 0.0
  %718 = vmatprep.subr.mxu0 0.0
  %719 = vmatpush1.msra.mxu0 0.0
  %720 = vmatprep.subr.mxu0 0.0
  %721 = vmatpush1.msra.mxu0 0.0
  %722 = vmatprep.subr.mxu0 0.0
  %723 = vmatpush1.msra.mxu0 0.0
  %724 = vmatprep.subr.mxu0 0.0
  %725 = vmatpush1.msra.mxu0 0.0
  %726 = vmatprep.subr.mxu0 0.0
  %727 = vmatpush1.msra.mxu0 0.0
  %728 = vmatprep.subr.mxu0 0.0
  %729 = vmatpush1.msra.mxu0 0.0
  %730 = vmatprep.subr.mxu0 0.0
  %731 = vmatpush1.msra.mxu0 0.0
  %732 = vmatprep.subr.mxu0 0.0
  %733 = vmatpush1.msra.mxu0 0.0
  %734 = vmatprep.subr.mxu0 0.0
  %735 = vmatpush1.msra.mxu0 0.0
  %736 = vmatprep.subr.mxu0 0.0
  %737 = vmatpush1.msra.mxu0 0.0
  %738 = vmatprep.mubr.f32.mxu0 0.0
  %739 = vmatmul.mubr.f32.gmra.mrb[0].mxu0 %v672
  %v740 = vpop.f32.mrb[0].mxu0
  %v741 = vadd.f32 0.0, %v740
  %v742 = vpop.f32.mrb[0].mxu0
  %v743 = vadd.f32 0.0, %v742
  %744 = vdwg.mxu0
  %745 = vmatprep.subr.mxu0 %v558
  %746 = vmatpush1.msra.mxu0 %v557
  %747 = vmatprep.subr.mxu0 %v574
  %748 = vmatpush1.msra.mxu0 %v573
  %749 = vmatprep.subr.mxu0 %v590
  %750 = vmatpush1.msra.mxu0 %v589
  %751 = vmatprep.subr.mxu0 %v606
  %752 = vmatpush1.msra.mxu0 %v605
  %753 = vmatprep.subr.mxu0 %v541
  %754 = vmatpush1.msra.mxu0 %v540
  %755 = vmatprep.subr.mxu0 %v622
  %756 = vmatpush1.msra.mxu0 %v621
  %757 = vmatprep.subr.mxu0 %v638
  %758 = vmatpush1.msra.mxu0 %v637
  %759 = vmatprep.subr.mxu0 %v654
  %760 = vmatpush1.msra.mxu0 %v653
  %761 = vmatprep.subr.mxu0 %v670
  %762 = vmatpush1.msra.mxu0 %v669
  %763 = vmatprep.subr.mxu0 0.0
  %764 = vmatpush1.msra.mxu0 0.0
  %765 = vmatprep.subr.mxu0 0.0
  %766 = vmatpush1.msra.mxu0 0.0
  %767 = vmatprep.subr.mxu0 0.0
  %768 = vmatpush1.msra.mxu0 0.0
  %769 = vmatprep.subr.mxu0 0.0
  %770 = vmatpush1.msra.mxu0 0.0
  %771 = vmatprep.subr.mxu0 0.0
  %772 = vmatpush1.msra.mxu0 0.0
  %773 = vmatprep.subr.mxu0 0.0
  %774 = vmatpush1.msra.mxu0 0.0
  %775 = vmatprep.subr.mxu0 0.0
  %776 = vmatpush1.msra.mxu0 0.0
  %777 = vmatprep.subr.mxu0 0.0
  %778 = vmatpush1.msra.mxu0 0.0
  %779 = vmatprep.subr.mxu0 0.0
  %780 = vmatpush1.msra.mxu0 0.0
  %781 = vmatprep.subr.mxu0 0.0
  %782 = vmatpush1.msra.mxu0 0.0
  %783 = vmatprep.subr.mxu0 0.0
  %784 = vmatpush1.msra.mxu0 0.0
  %785 = vmatprep.subr.mxu0 0.0
  %786 = vmatpush1.msra.mxu0 0.0
  %787 = vmatprep.subr.mxu0 0.0
  %788 = vmatpush1.msra.mxu0 0.0
  %789 = vmatprep.subr.mxu0 0.0
  %790 = vmatpush1.msra.mxu0 0.0
  %791 = vmatprep.subr.mxu0 0.0
  %792 = vmatpush1.msra.mxu0 0.0
  %793 = vmatprep.subr.mxu0 0.0
  %794 = vmatpush1.msra.mxu0 0.0
  %795 = vmatprep.subr.mxu0 0.0
  %796 = vmatpush1.msra.mxu0 0.0
  %797 = vmatprep.subr.mxu0 0.0
  %798 = vmatpush1.msra.mxu0 0.0
  %799 = vmatprep.subr.mxu0 0.0
  %800 = vmatpush1.msra.mxu0 0.0
  %801 = vmatprep.subr.mxu0 0.0
  %802 = vmatpush1.msra.mxu0 0.0
  %803 = vmatprep.subr.mxu0 0.0
  %804 = vmatpush1.msra.mxu0 0.0
  %805 = vmatprep.subr.mxu0 0.0
  %806 = vmatpush1.msra.mxu0 0.0
  %807 = vmatprep.subr.mxu0 0.0
  %808 = vmatpush1.msra.mxu0 0.0
  %809 = vmatprep.mubr.f32.mxu0 0.0
  %810 = vmatmul.mubr.f32.gmra.mrb[0].mxu0 %v672
  %v811 = vpop.f32.mrb[0].mxu0
  %v812 = vadd.f32 0.0, %v811
  %v813 = vpop.f32.mrb[0].mxu0
  %v814 = vadd.f32 0.0, %v813
  %815 = vdwg.mxu0
  %v816 = vld [vmem:[%s3] sm:$0xff]
  %v817 = vadd.f32 %v741, %v743
  %v818 = vadd.f32 %v817, %v812
  %v819 = vadd.f32 %v818, %v814
  %820 = vadd.xlane.f32.xlu0 %v819
  %v821 = vpop.xlane.xlu0 %820
  %v822 = vmul.f32 %v821, %v445
  %v823 = vsub.f32 %v741, %v822
  %v824 = vsub.f32 %v743, %v822
  %v825 = vsub.f32 %v812, %v822
  %v826 = vsub.f32 %v814, %v822
  %v827 = vmul.f32 %v823, %v823
  %v828 = vmul.f32 %v824, %v824
  %v829 = vmul.f32 %v825, %v825
  %v830 = vmul.f32 %v826, %v826
  %v831 = vadd.f32 %v827, %v828
  %v832 = vadd.f32 %v831, %v829
  %v833 = vadd.f32 %v832, %v830
  %834 = vadd.xlane.f32.xlu0 %v833
  %v835 = vpop.xlane.xlu0 %834
  %v836 = vmul.f32 %v835, %v445
  %v837 = vadd.f32 %v836, 1e-05
  %v838 = vrsqrt.pop %v837
  %v839 = vmul.f32 %v816, %v838
  %v840 = vmul.f32 %v822, %v839
  %842 = vrot.lane.b32.xlu0 %v840, 1
  %v843 = vpop.permute.xlu0 %842
  %v845 = vsub.f32 %v816, %v843
  %847 = vset.pattern.permute.xlu0 2
  %848 = vperm.xlu0 %847, %v839
  %v849 = vpop.permute.xlu0 %848
  %v851 = vmul.f32 %v741, %v849
  %v852 = vmul.f32 %v743, %v849
  %v853 = vmul.f32 %v812, %v849
  %v854 = vmul.f32 %v814, %v849
  %856 = vset.pattern.permute.xlu0 3
  %857 = vperm.xlu0 %856, %v845
  %v858 = vpop.permute.xlu0 %857
  %v860 = vadd.f32 %v851, %v858
  %v861 = vadd.f32 %v852, %v858
  %v862 = vadd.f32 %v853, %v858
  %v863 = vadd.f32 %v854, %v858
  %v864 = vadd.f32 %v860, %v526
  %v865 = vadd.f32 %v861, %v527
  %v866 = vadd.f32 %v862, %v528
  %v867 = vadd.f32 %v863, %v529
  %868 = vst [vmem:[%s4] sm:$0xff] %v864
  %869 = vst [vmem:[%s4 + $0x8] sm:$0xff] %v865
  %870 = vst [vmem:[%s4 + $0x10] sm:$0xff] %v866
  %871 = vst [vmem:[%s4 + $0x18] sm:$0xff] %v867
  // Predicated region
  $region18: #{residual_block.1} parent=0 // pred_check
    _
  $region19: #{residual_block.1} parent=0 // pred_check_branch
    %873 = sbr.rel (0) target = $region21
  $region20: #{residual_block.1} parent=0 // pred_region
    _
  $region21: #{residual_block.1} parent=0 // pred_fallthru
    _
  // Predicated region
  $region22: #{residual_block.1} parent=0 // pred_check
    _
  $region23: #{residual_block.1} parent=0 // pred_check_branch
    %875 = sbr.rel (0) target = $region25
  $region24: #{residual_block.1} parent=0 // pred_region
    _
  $region25: #{residual_block.1} parent=0 // pred_fallthru
    _

</llo_original>
